<compile_context>
chip_gen: v7x
topology: tpu7x:2x2x1
jax: 0.10.0
libtpu: 0.0.40
codegen_flags: <defaults>
</compile_context>

<pallas_src>
import jax
import jax.numpy as jnp
from jax.experimental import pallas as pl
from jax.experimental.pallas import tpu as pltpu

_LANE = 128
_SUBLANE = 8


def _round_up(x, m):
    return ((x + m - 1) // m) * m


def _vmem_plan():
    """Return (planning budget, vmem_limit_bytes) that is safe on v5e/v6e/v7x."""
    cap = 64 * 1024 * 1024  # v7x per-TC physical VMEM = smallest generation
    try:
        info = pltpu.get_tpu_info()
        cap = int(getattr(info, "vmem_capacity_bytes", cap)) or cap
    except Exception:
        pass
    budget = min(int(cap * 0.60), 40 * 1024 * 1024)   # what we plan buffers against
    limit = min(int(cap * 0.80), 50 * 1024 * 1024)    # scoped-VMEM limit we request
    return budget, limit


def _clamp_tile(tile, num_edges):
    """Multiple of 128, >= 128, <= padded edge count; prefer >= 2 grid steps."""
    e128 = _round_up(max(num_edges, 1), _LANE)
    tile = min(int(tile), e128)
    if e128 >= 2 * _LANE:
        # Keep at least 2 grid steps so "parallel" can shard the edge grid
        # across v7x's two TensorCores.
        tile = min(tile, _round_up((e128 + 1) // 2, _LANE))
    tile = (tile // _LANE) * _LANE
    return max(_LANE, tile)


# ----------------------------- kernels ------------------------------------- #

def _fused_edge_distance_kernel(h_ref, src_ref, dst_ref, out_ref):
    # h_ref:   (D, N) VMEM-resident node features (constant index_map).
    # src/dst: (1, TILE) int32 endpoint ids for this edge tile.
    # out_ref: (1, TILE) lane-dense distances.
    h = h_ref[...]
    d = h.shape[0]
    te = src_ref.shape[1]
    src = jnp.broadcast_to(src_ref[...], (d, te))
    dst = jnp.broadcast_to(dst_ref[...], (d, te))
    # In-vreg gather along the lane (node) axis; indices are guaranteed valid.
    a = jnp.take_along_axis(h, dst, axis=1, mode="promise_in_bounds")  # (D, TILE)
    b = jnp.take_along_axis(h, src, axis=1, mode="promise_in_bounds")
    if a.dtype != jnp.float32:   # bf16 inputs: promote only in-vreg
        a = a.astype(jnp.float32)
        b = b.astype(jnp.float32)
    diff = a - b
    out_ref[...] = jnp.sqrt(
        jnp.sum(diff * diff, axis=0, keepdims=True)).astype(out_ref.dtype)


def _pregathered_edge_distance_kernel(hsrc_ref, hdst_ref, out_ref):
    # hsrc/hdst: (D, TILE) pre-gathered endpoint features (features on sublanes).
    a = hdst_ref[...]
    b = hsrc_ref[...]
    if a.dtype != jnp.float32:
        a = a.astype(jnp.float32)
        b = b.astype(jnp.float32)
    diff = a - b
    out_ref[...] = jnp.sqrt(
        jnp.sum(diff * diff, axis=0, keepdims=True)).astype(out_ref.dtype)


# ----------------------------- wrapper -------------------------------------- #

def decoder_euclidean_forward(h, src_idx, dst_idx, *, max_fused_nodes=4096,
                              interpret=False):
    """Pallas implementation of decoder_euclidean.forward.

    h:        [N, D] node features (float32 or bfloat16)
    src_idx:  [E]    integer source node id per edge (selected etype)
    dst_idx:  [E]    integer destination node id per edge
    returns:  [E, 1] distance scores in h.dtype (matches torch.norm output dtype)
    """
    N, D = h.shape
    E = src_idx.shape[0]
    out_dtype = h.dtype

    if E == 0:
        return jnp.zeros((0, 1), dtype=out_dtype)

    src_idx = src_idx.astype(jnp.int32)
    dst_idx = dst_idx.astype(jnp.int32)

    itemsize = jnp.dtype(h.dtype).itemsize
    d_pad = _round_up(D, _SUBLANE)
    n_pad = _round_up(N, _LANE)
    budget, limit = _vmem_plan()

    compiler_params = pltpu.CompilerParams(
        dimension_semantics=("parallel",),
        vmem_limit_bytes=limit,
    )

    # ---------------- fused path: endpoint gather inside the kernel ----------
    # VMEM plan: resident h_t (x2 pipeline buffers, lane/sublane padded)
    #          + 2 index blocks (x2 buffers) + output (x2) + room for the
    #            gathered (D, TILE) f32 operands / temporaries.
    h_resident = 2 * d_pad * n_pad * itemsize
    per_edge = 6 * d_pad * 4 + 128
    fused_fits = (
        n_pad <= max_fused_nodes                      # lane-gather cost ~ N/128 per vreg
        and h_resident + per_edge * _LANE <= budget   # at least one 128-edge tile fits
    )

    if fused_fits:
        tile = (budget - h_resident) // per_edge
        tile = _clamp_tile(min(tile, 4096), E)
        e_pad = _round_up(E, tile)
        pad = e_pad - E
        src2d = jnp.pad(src_idx, (0, pad)).reshape(1, e_pad)   # padded edges -> node 0
        dst2d = jnp.pad(dst_idx, (0, pad)).reshape(1, e_pad)
        h_t = h.T                                              # (D, N), tiny relayout
        grid = (e_pad // tile,)
        cost = pl.CostEstimate(
            flops=3 * D * E,
            transcendentals=E,
            bytes_accessed=N * D * itemsize + 12 * E,
        )
        try:
            out = pl.pallas_call(
                _fused_edge_distance_kernel,
                out_shape=jax.ShapeDtypeStruct((1, e_pad), jnp.float32),
                grid_spec=pltpu.PrefetchScalarGridSpec(
                    num_scalar_prefetch=0,
                    grid=grid,
                    in_specs=[
                        pl.BlockSpec((D, N), lambda i: (0, 0)),      # resident node feats
                        pl.BlockSpec((1, tile), lambda i: (0, i)),   # src ids
                        pl.BlockSpec((1, tile), lambda i: (0, i)),   # dst ids
                    ],
                    out_specs=pl.BlockSpec((1, tile), lambda i: (0, i)),
                ),
                compiler_params=compiler_params,
                cost_estimate=cost,
                interpret=interpret,
            )(h_t, src2d, dst2d)
            out = jax.block_until_ready(out)
            return out[0, :E][:, None].astype(out_dtype)
        except Exception:
            # TODO(synk): Mosaic on this toolchain rejected the in-kernel
            # take_along_axis lane gather -- fall back to the pre-gathered path.
            pass

    # ------------- fallback path: XLA gather, kernel reduces only ------------
    # Tile targets ~4 MiB of real HBM bytes per input per step and is clamped to
    # the explicit VMEM budget (2 inputs x 2 pipeline buffers + output).
    target_tile_bytes = 4 * 1024 * 1024
    tile = target_tile_bytes // max(1, D * itemsize)
    vmem_per_edge = 4 * d_pad * itemsize + 2 * _SUBLANE * 4
    tile = min(tile, budget // vmem_per_edge)
    tile = _clamp_tile(tile, E)
    e_pad = _round_up(E, tile)
    pad = e_pad - E
    src_p = jnp.pad(src_idx, (0, pad))     # padded edges gather node 0 -> distance 0
    dst_p = jnp.pad(dst_idx, (0, pad))

    # Column gather straight into the feature-major [D, E_pad] layout.
    # TODO(synk): benchmark a contiguous row gather (h[idx] -> [E, D]) plus an
    # in-kernel transpose against this column gather; the fused path above
    # already removes the gather entirely whenever h fits in VMEM.
    h_t = h.T                                   # [D, N]
    h_src_t = jnp.take(h_t, src_p, axis=1)      # [D, E_pad]
    h_dst_t = jnp.take(h_t, dst_p, axis=1)      # [D, E_pad]

    grid = (e_pad // tile,)
    cost = pl.CostEstimate(
        flops=3 * D * E,
        transcendentals=E,
        bytes_accessed=2 * e_pad * D * itemsize + 4 * e_pad,
    )
    out = pl.pallas_call(
        _pregathered_edge_distance_kernel,
        out_shape=jax.ShapeDtypeStruct((1, e_pad), jnp.float32),
        grid_spec=pltpu.PrefetchScalarGridSpec(
            num_scalar_prefetch=0,
            grid=grid,
            in_specs=[
                pl.BlockSpec((D, tile), lambda i: (0, i)),
                pl.BlockSpec((D, tile), lambda i: (0, i)),
            ],
            out_specs=pl.BlockSpec((1, tile), lambda i: (0, i)),
        ),
        compiler_params=compiler_params,
        cost_estimate=cost,
        interpret=interpret,
    )(h_src_t, h_dst_t)
    return out[0, :E][:, None].astype(out_dtype)


if __name__ == "__main__":
    key = jax.random.PRNGKey(0)
    k_h, k_src, k_dst, k_h2, k_s2, k_d2 = jax.random.split(key, 6)

    # Small synthetic graph: N nodes, D-dim features, E edges of one etype.
    N, D, E = 16, 32, 24
    h = jax.random.normal(k_h, (N, D), dtype=jnp.float32)
    src_idx = jax.random.randint(k_src, (E,), 0, N, dtype=jnp.int32)
    dst_idx = jax.random.randint(k_dst, (E,), 0, N, dtype=jnp.int32)

    dist = decoder_euclidean_forward(h, src_idx, dst_idx)
    dist = jax.block_until_ready(dist)
    ref = jnp.linalg.norm(h[dst_idx] - h[src_idx], axis=-1, keepdims=True)
    assert dist.shape == (E, 1)
    assert jnp.allclose(dist, ref, atol=1e-5, rtol=1e-5), "mismatch vs reference"

    # Larger graph: multi-tile grid (>= 2 steps) with a ragged (padded) last tile.
    N2, D2, E2 = 512, 32, 2500
    h2 = jax.random.normal(k_h2, (N2, D2), dtype=jnp.float32)
    src2 = jax.random.randint(k_s2, (E2,), 0, N2, dtype=jnp.int32)
    dst2 = jax.random.randint(k_d2, (E2,), 0, N2, dtype=jnp.int32)

    dist2 = decoder_euclidean_forward(h2, src2, dst2)
    dist2 = jax.block_until_ready(dist2)
    ref2 = jnp.linalg.norm(h2[dst2] - h2[src2], axis=-1, keepdims=True)
    assert dist2.shape == (E2, 1)
    assert jnp.allclose(dist2, ref2, atol=1e-4, rtol=1e-4), "mismatch vs reference (large)"

    print("KERNEL_OK")
</pallas_src>

<mosaic_0001>
module attributes {stable_mosaic.version = 11 : i64} {
  func.func @_fused_edge_distance_kernel(%arg0: i32, %arg1: memref<32x16xf32, #tpu.memory_space<vmem>>, %arg2: memref<1x128xi32, #tpu.memory_space<vmem>>, %arg3: memref<1x128xi32, #tpu.memory_space<vmem>>, %arg4: memref<1x128xf32, #tpu.memory_space<vmem>>) attributes {dimension_semantics = [#tpu.dimension_semantics<parallel>], iteration_bounds = array<i64: 1>, scalar_prefetch = 0 : i64, scratch_operands = 0 : i64, tpu.core_type = #tpu.core_type<tc>, window_params = [{pipeline_mode = #tpu.pipeline_mode<synchronous>, transform_indices = @transform_0, window_bounds = array<i64: 32, 16>}, {transform_indices = @transform_1, window_bounds = array<i64: 1, 128>}, {transform_indices = @transform_2, window_bounds = array<i64: 1, 128>}, {transform_indices = @transform_3, window_bounds = array<i64: 1, 128>}]} {
    %c0 = arith.constant 0 : index
    %c0_0 = arith.constant 0 : index
    %0 = vector.load %arg1[%c0, %c0_0] : memref<32x16xf32, #tpu.memory_space<vmem>>, vector<32x16xf32>
    %c0_1 = arith.constant 0 : index
    %c0_2 = arith.constant 0 : index
    %1 = vector.load %arg2[%c0_1, %c0_2] : memref<1x128xi32, #tpu.memory_space<vmem>>, vector<1x128xi32>
    %2 = vector.shape_cast %1 : vector<1x128xi32> to vector<1x128xi32>
    %3 = vector.broadcast %2 : vector<1x128xi32> to vector<32x128xi32>
    %c0_3 = arith.constant 0 : index
    %c0_4 = arith.constant 0 : index
    %4 = vector.load %arg3[%c0_3, %c0_4] : memref<1x128xi32, #tpu.memory_space<vmem>>, vector<1x128xi32>
    %5 = vector.shape_cast %4 : vector<1x128xi32> to vector<1x128xi32>
    %6 = vector.broadcast %5 : vector<1x128xi32> to vector<32x128xi32>
    %7 = vector.shape_cast %6 : vector<32x128xi32> to vector<32x128x1xi32>
    %8 = vector.shape_cast %7 : vector<32x128x1xi32> to vector<32x128xi32>
    %9 = tpu.dynamic_gather %0[%8] in [1] : vector<32x16xf32>, vector<32x128xi32> -> vector<32x128xf32>
    %10 = vector.shape_cast %3 : vector<32x128xi32> to vector<32x128x1xi32>
    %11 = vector.shape_cast %10 : vector<32x128x1xi32> to vector<32x128xi32>
    %12 = tpu.dynamic_gather %0[%11] in [1] : vector<32x16xf32>, vector<32x128xi32> -> vector<32x128xf32>
    %13 = arith.subf %9, %12 : vector<32x128xf32>
    %14 = arith.mulf %13, %13 : vector<32x128xf32>
    %cst = arith.constant dense<0.000000e+00> : vector<128xf32>
    %15 = vector.multi_reduction <add>, %14, %cst [0] : vector<32x128xf32> to vector<128xf32>
    %16 = vector.shape_cast %15 : vector<128xf32> to vector<1x128xf32>
    %17 = math.sqrt %16 : vector<1x128xf32>
    %c0_5 = arith.constant 0 : index
    %c0_6 = arith.constant 0 : index
    %18 = vector.load %arg4[%c0_5, %c0_6] : memref<1x128xf32, #tpu.memory_space<vmem>>, vector<1x128xf32>
    tpu.vector_store %arg4[%c0_5, %c0_6], %17 {strides = array<i32>} : memref<1x128xf32, #tpu.memory_space<vmem>>, vector<1x128xf32>,
    return
  }
  func.func @transform_0(%arg0: i32) -> (i32, i32) {
    %c0_i32 = arith.constant 0 : i32
    %c0_i32_0 = arith.constant 0 : i32
    %c0_i32_1 = arith.constant 0 : i32
    return %c0_i32, %c0_i32_0 : i32, i32
  }
  func.func @transform_1(%arg0: i32) -> (i32, i32) {
    %c0_i32 = arith.constant 0 : i32
    %c0_i32_0 = arith.constant 0 : i32
    return %c0_i32, %arg0 : i32, i32
  }
  func.func @transform_2(%arg0: i32) -> (i32, i32) {
    %c0_i32 = arith.constant 0 : i32
    %c0_i32_0 = arith.constant 0 : i32
    return %c0_i32, %arg0 : i32, i32
  }
  func.func @transform_3(%arg0: i32) -> (i32, i32) {
    %c0_i32 = arith.constant 0 : i32
    %c0_i32_0 = arith.constant 0 : i32
    return %c0_i32, %arg0 : i32, i32
  }
}

module attributes {stable_mosaic.version = 11 : i64} {
  func.func @_pregathered_edge_distance_kernel(%arg0: i32, %arg1: memref<32x128xf32, #tpu.memory_space<vmem>>, %arg2: memref<32x128xf32, #tpu.memory_space<vmem>>, %arg3: memref<1x128xf32, #tpu.memory_space<vmem>>) attributes {dimension_semantics = [#tpu.dimension_semantics<parallel>], iteration_bounds = array<i64: 1>, scalar_prefetch = 0 : i64, scratch_operands = 0 : i64, tpu.core_type = #tpu.core_type<tc>, window_params = [{transform_indices = @transform_0, window_bounds = array<i64: 32, 128>}, {transform_indices = @transform_1, window_bounds = array<i64: 32, 128>}, {transform_indices = @transform_2, window_bounds = array<i64: 1, 128>}]} {
    %c0 = arith.constant 0 : index
    %c0_0 = arith.constant 0 : index
    %0 = vector.load %arg2[%c0, %c0_0] : memref<32x128xf32, #tpu.memory_space<vmem>>, vector<32x128xf32>
    %c0_1 = arith.constant 0 : index
    %c0_2 = arith.constant 0 : index
    %1 = vector.load %arg1[%c0_1, %c0_2] : memref<32x128xf32, #tpu.memory_space<vmem>>, vector<32x128xf32>
    %2 = arith.subf %0, %1 : vector<32x128xf32>
    %3 = arith.mulf %2, %2 : vector<32x128xf32>
    %cst = arith.constant dense<0.000000e+00> : vector<128xf32>
    %4 = vector.multi_reduction <add>, %3, %cst [0] : vector<32x128xf32> to vector<128xf32>
    %5 = vector.shape_cast %4 : vector<128xf32> to vector<1x128xf32>
    %6 = math.sqrt %5 : vector<1x128xf32>
    %c0_3 = arith.constant 0 : index
    %c0_4 = arith.constant 0 : index
    %7 = vector.load %arg3[%c0_3, %c0_4] : memref<1x128xf32, #tpu.memory_space<vmem>>, vector<1x128xf32>
    tpu.vector_store %arg3[%c0_3, %c0_4], %6 {strides = array<i32>} : memref<1x128xf32, #tpu.memory_space<vmem>>, vector<1x128xf32>,
    return
  }
  func.func @transform_0(%arg0: i32) -> (i32, i32) {
    %c0_i32 = arith.constant 0 : i32
    %c0_i32_0 = arith.constant 0 : i32
    return %c0_i32, %arg0 : i32, i32
  }
  func.func @transform_1(%arg0: i32) -> (i32, i32) {
    %c0_i32 = arith.constant 0 : i32
    %c0_i32_0 = arith.constant 0 : i32
    return %c0_i32, %arg0 : i32, i32
  }
  func.func @transform_2(%arg0: i32) -> (i32, i32) {
    %c0_i32 = arith.constant 0 : i32
    %c0_i32_0 = arith.constant 0 : i32
    return %c0_i32, %arg0 : i32, i32
  }
}

</mosaic_0001>

<llo_original>
// kernel: tpu_custom_call.1
$region0: #{tpu_custom_call.1}
  #allocation0 [shape = 'u32[]', space=smem, size = 0x4, offset = 0x4, fixed_abs, tag = 'smem constant byte address 0x4 - core index']
  #allocation1 [shape = 'u32[144,128]{1,0:T(1,128)}', space=vmem, size = 0x12000, scoped, tag = 'internal scratch']
  %s0 = inlined_call_operand.vmem [shape: f32[32,16], index: 0, kind: input, shape index: {}]
  %s1 = inlined_call_operand.vmem [shape: s32[1,128], index: 1, kind: input, shape index: {}]
  %s2 = inlined_call_operand.vmem [shape: s32[1,128], index: 2, kind: input, shape index: {}]
  %s3 = inlined_call_operand.hbm [shape: f32[1,128], index: 3, kind: output, shape index: {}]
  %s4 = sld [smem:[#allocation0]]
  $region22: #{tpu_custom_call.1} parent=0
    _
  %s6 = ssub.s32 1, %s4
  %s7 = scalar_select 0, %s6, %s4
  $region1: #{tpu_custom_call.1} parent=0
    #allocation2 [shape = 'u8[512]{0}', space=vmem, size = 0x400, scoped, tag = 'output window, operand 0, single buffered']
    #allocation3 [shape = 's32[1]{0}', space=sflag, size = 0x4, scoped, tag = 'scoped memory for tpu_custom_call.1']
    %8 = vsyncpa [#allocation3], 0
    // Predicated region
    $region2: #{tpu_custom_call.1} parent=1 // pred_check
      _
    $region3: #{tpu_custom_call.1} parent=1 // pred_check_branch
      %10 = sbr.rel (0) target = $region5
    $region4: #{tpu_custom_call.1} parent=1 // pred_region
      _
    $region5: #{tpu_custom_call.1} parent=1 // pred_fallthru
      _
    // Predicated region
    $region6: #{tpu_custom_call.1} parent=1 // pred_check
      _
    $region7: #{tpu_custom_call.1} parent=1 // pred_check_branch
      %12 = sbr.rel (0) target = $region9
    $region8: #{tpu_custom_call.1} parent=1 // pred_region
      _
    $region9: #{tpu_custom_call.1} parent=1 // pred_fallthru
      _
    // Predicated region
    $region10: #{tpu_custom_call.1} parent=1 // pred_check
      _
    $region11: #{tpu_custom_call.1} parent=1 // pred_check_branch
      %14 = sbr.rel (0) target = $region13
    $region12: #{tpu_custom_call.1} parent=1 // pred_region
      _
    $region13: #{tpu_custom_call.1} parent=1 // pred_fallthru
      _
    %v15 = vld [vmem:[%s0] sm:$0xff]
    %v16 = vld [vmem:[%s0 + $0x8] sm:$0xff]
    %v17 = vld [vmem:[%s0 + $0x10] sm:$0xff]
    %v18 = vld [vmem:[%s0 + $0x18] sm:$0xff]
    %v19 = vld [vmem:[%s1] sm:$0x1]
    %v20 = vlaneseq
    %v21 = vshrl.u32 %v20, 7
    %v22 = vsub.s32 0, %v21
    %v23 = vrot.slane %v19, %v22
    %v24 = vld [vmem:[%s2] sm:$0x1]
    %v25 = vlaneseq
    %v26 = vshrl.u32 %v25, 7
    %v27 = vsub.s32 0, %v26
    %v28 = vrot.slane %v24, %v27
    %29 = vset.pattern.permute.xlu0 %v28
    %30 = vperm.xlu0 %29, %v15
    %v31 = vpop.permute.xlu0 %30
    %32 = vset.pattern.permute.xlu0 %v28
    %33 = vperm.xlu0 %32, %v16
    %v34 = vpop.permute.xlu0 %33
    %35 = vset.pattern.permute.xlu0 %v28
    %36 = vperm.xlu0 %35, %v17
    %v37 = vpop.permute.xlu0 %36
    %38 = vset.pattern.permute.xlu0 %v28
    %39 = vperm.xlu0 %38, %v18
    %v40 = vpop.permute.xlu0 %39
    %41 = vset.pattern.permute.xlu0 %v23
    %42 = vperm.xlu0 %41, %v15
    %v43 = vpop.permute.xlu0 %42
    %44 = vset.pattern.permute.xlu0 %v23
    %45 = vperm.xlu0 %44, %v16
    %v46 = vpop.permute.xlu0 %45
    %47 = vset.pattern.permute.xlu0 %v23
    %48 = vperm.xlu0 %47, %v17
    %v49 = vpop.permute.xlu0 %48
    %50 = vset.pattern.permute.xlu0 %v23
    %51 = vperm.xlu0 %50, %v18
    %v52 = vpop.permute.xlu0 %51
    %v53 = vsub.f32 %v31, %v43
    %v54 = vsub.f32 %v34, %v46
    %v55 = vsub.f32 %v37, %v49
    %v56 = vsub.f32 %v40, %v52
    %v57 = vmul.f32 %v53, %v53
    %v58 = vmul.f32 %v54, %v54
    %v59 = vmul.f32 %v55, %v55
    %v60 = vmul.f32 %v56, %v56
    %v61 = vadd.f32 %v57, %v58
    %v62 = vadd.f32 %v61, %v59
    %v63 = vadd.f32 %v62, %v60
    %v64 = vrot.slane %v63, 4
    %v65 = vadd.f32 %v63, %v64
    %v66 = vrot.slane %v65, 2
    %v67 = vadd.f32 %v65, %v66
    %v68 = vrot.slane %v67, 1
    %v69 = vadd.f32 %v67, %v68
    %v70 = vrsqrt.pop %v69
    %v71 = vmul.f32 %v69, %v70
    %vm72 = vcmp.eq.f32.partialorder %v69, inf
    %v73 = vsel %vm72, %v69, %v71
    %vm74 = vcmp.eq.f32.partialorder %v69, 0.0
    %v75 = vand.u32 %v69, 2147483648
    %v76 = vsel %vm74, %v75, %v73
    %77 = vst [vmem:[#allocation2] sm:$0x1] %v76
    // Predicated region
    $region14: #{tpu_custom_call.1} parent=1 // pred_check
      _
    $region15: #{tpu_custom_call.1} parent=1 // pred_check_branch
      %79 = sbr.rel (0) target = $region17
    $region16: #{tpu_custom_call.1} parent=1 // pred_region
      %s81 = ssub.s32 16, 16
      %82 = vsyncadd [#allocation3], %s81
      %s84 = sshll.u32 [#allocation2], 4
      %s85 = int_to_ptr.vmem [resolvable:$true] %s84
      %87 = dma.vmem_to_hbm [thread:$0]  %s85, 16, %s3, [#allocation3]
    $region17: #{tpu_custom_call.1} parent=1 // pred_fallthru
      _
    // Predicated region
    $region18: #{tpu_custom_call.1} parent=1 // pred_check
      _
    $region19: #{tpu_custom_call.1} parent=1 // pred_check_branch
      %89 = sbr.rel (0) target = $region21
    $region20: #{tpu_custom_call.1} parent=1 // pred_region
      %90 = dma.done [#allocation3], 16
    $region21: #{tpu_custom_call.1} parent=1 // pred_fallthru
      _
    %91 = vsyncpa [#allocation3], 1

// kernel: tpu_custom_call.1
$region0: #{tpu_custom_call.1}
  #allocation0 [shape = 'u32[]', space=smem, size = 0x4, offset = 0x4, fixed_abs, tag = 'smem constant byte address 0x4 - core index']
  #allocation1 [shape = 'u32[144,128]{1,0:T(1,128)}', space=vmem, size = 0x12000, scoped, tag = 'internal scratch']
  %s0 = inlined_call_operand.hbm [shape: f32[32,128], index: 0, kind: input, shape index: {}]
  %s1 = inlined_call_operand.hbm [shape: f32[32,128], index: 1, kind: input, shape index: {}]
  %s2 = inlined_call_operand.hbm [shape: f32[1,128], index: 2, kind: output, shape index: {}]
  %s3 = sld [smem:[#allocation0]]
  $region26: #{tpu_custom_call.1} parent=0
    _
  %s5 = ssub.s32 1, %s3
  %s6 = scalar_select 0, %s5, %s3
  $region1: #{tpu_custom_call.1} parent=0
    #allocation2 [shape = 'u8[16384]{0}', space=vmem, size = 0x4000, scoped, tag = 'input window, operand 0, single buffered']
    #allocation3 [shape = 's32[1]{0}', space=sflag, size = 0x4, scoped, tag = 'scoped memory for tpu_custom_call.1']
    #allocation4 [shape = 's32[1]{0}', space=sflag, size = 0x4, scoped, tag = 'scoped memory for tpu_custom_call.1']
    #allocation5 [shape = 'u8[16384]{0}', space=vmem, size = 0x4000, scoped, tag = 'input window, operand 1, single buffered']
    #allocation6 [shape = 's32[1]{0}', space=sflag, size = 0x4, scoped, tag = 'scoped memory for tpu_custom_call.1']
    #allocation7 [shape = 'u8[512]{0}', space=vmem, size = 0x400, scoped, tag = 'output window, operand 0, single buffered']
    %7 = vsyncpa [#allocation3], 0
    %8 = vsyncpa [#allocation6], 0
    %9 = vsyncpa [#allocation4], 0
    // Predicated region
    $region2: #{tpu_custom_call.1} parent=1 // pred_check
      _
    $region3: #{tpu_custom_call.1} parent=1 // pred_check_branch
      %11 = sbr.rel (0) target = $region5
    $region4: #{tpu_custom_call.1} parent=1 // pred_region
      %s13 = ssub.s32 512, 512
      %14 = vsyncadd [#allocation3], %s13
      %s15 = sshll.u32 [#allocation2], 4
      %s16 = int_to_ptr.vmem [resolvable:$true] %s15
      %21 = dma.hbm_to_vmem [thread:$0]  %s0, 512, %s16, [#allocation3], 128, 128, 8
    $region5: #{tpu_custom_call.1} parent=1 // pred_fallthru
      _
    // Predicated region
    $region6: #{tpu_custom_call.1} parent=1 // pred_check
      _
    $region7: #{tpu_custom_call.1} parent=1 // pred_check_branch
      %23 = sbr.rel (0) target = $region9
    $region8: #{tpu_custom_call.1} parent=1 // pred_region
      %s25 = ssub.s32 512, 512
      %26 = vsyncadd [#allocation6], %s25
      %s27 = sshll.u32 [#allocation5], 4
      %s28 = int_to_ptr.vmem [resolvable:$true] %s27
      %33 = dma.hbm_to_vmem [thread:$0]  %s1, 512, %s28, [#allocation6], 128, 128, 8
    $region9: #{tpu_custom_call.1} parent=1 // pred_fallthru
      _
    // Predicated region
    $region10: #{tpu_custom_call.1} parent=1 // pred_check
      _
    $region11: #{tpu_custom_call.1} parent=1 // pred_check_branch
      %35 = sbr.rel (0) target = $region13
    $region12: #{tpu_custom_call.1} parent=1 // pred_region
      %36 = dma.done [#allocation3], 512
    $region13: #{tpu_custom_call.1} parent=1 // pred_fallthru
      _
    // Predicated region
    $region14: #{tpu_custom_call.1} parent=1 // pred_check
      _
    $region15: #{tpu_custom_call.1} parent=1 // pred_check_branch
      %38 = sbr.rel (0) target = $region17
    $region16: #{tpu_custom_call.1} parent=1 // pred_region
      %39 = dma.done [#allocation6], 512
    $region17: #{tpu_custom_call.1} parent=1 // pred_fallthru
      _
    %v40 = vld [vmem:[#allocation5] sm:$0xff]
    %v41 = vld [vmem:[#allocation5 + $0x8] sm:$0xff]
    %v42 = vld [vmem:[#allocation5 + $0x10] sm:$0xff]
    %v43 = vld [vmem:[#allocation5 + $0x18] sm:$0xff]
    %v44 = vld [vmem:[#allocation2] sm:$0xff]
    %v45 = vld [vmem:[#allocation2 + $0x8] sm:$0xff]
    %v46 = vld [vmem:[#allocation2 + $0x10] sm:$0xff]
    %v47 = vld [vmem:[#allocation2 + $0x18] sm:$0xff]
    %v48 = vsub.f32 %v40, %v44
    %v49 = vsub.f32 %v41, %v45
    %v50 = vsub.f32 %v42, %v46
    %v51 = vsub.f32 %v43, %v47
    %v52 = vmul.f32 %v48, %v48
    %v53 = vmul.f32 %v49, %v49
    %v54 = vmul.f32 %v50, %v50
    %v55 = vmul.f32 %v51, %v51
    %v56 = vadd.f32 %v52, %v53
    %v57 = vadd.f32 %v56, %v54
    %v58 = vadd.f32 %v57, %v55
    %v59 = vrot.slane %v58, 4
    %v60 = vadd.f32 %v58, %v59
    %v61 = vrot.slane %v60, 2
    %v62 = vadd.f32 %v60, %v61
    %v63 = vrot.slane %v62, 1
    %v64 = vadd.f32 %v62, %v63
    %v65 = vrsqrt.pop %v64
    %v66 = vmul.f32 %v64, %v65
    %vm67 = vcmp.eq.f32.partialorder %v64, inf
    %v68 = vsel %vm67, %v64, %v66
    %vm69 = vcmp.eq.f32.partialorder %v64, 0.0
    %v70 = vand.u32 %v64, 2147483648
    %v71 = vsel %vm69, %v70, %v68
    %72 = vst [vmem:[#allocation7] sm:$0x1] %v71
    // Predicated region
    $region18: #{tpu_custom_call.1} parent=1 // pred_check
      _
    $region19: #{tpu_custom_call.1} parent=1 // pred_check_branch
      %74 = sbr.rel (0) target = $region21
    $region20: #{tpu_custom_call.1} parent=1 // pred_region
      %s76 = ssub.s32 16, 16
      %77 = vsyncadd [#allocation4], %s76
      %s79 = sshll.u32 [#allocation7], 4
      %s80 = int_to_ptr.vmem [resolvable:$true] %s79
      %82 = dma.vmem_to_hbm [thread:$0]  %s80, 16, %s2, [#allocation4]
    $region21: #{tpu_custom_call.1} parent=1 // pred_fallthru
      _
    // Predicated region
    $region22: #{tpu_custom_call.1} parent=1 // pred_check
      _
    $region23: #{tpu_custom_call.1} parent=1 // pred_check_branch
      %84 = sbr.rel (0) target = $region25
    $region24: #{tpu_custom_call.1} parent=1 // pred_region
      %85 = dma.done [#allocation4], 16
    $region25: #{tpu_custom_call.1} parent=1 // pred_fallthru
      _
    %86 = vsyncpa [#allocation3], 1
    %87 = vsyncpa [#allocation6], 1
    %88 = vsyncpa [#allocation4], 1

</llo_original>
